<compile_context>
chip_gen: v5e
topology: v5e:2x2
jax: 0.10.0
libtpu: 0.0.40
codegen_flags: <defaults>
</compile_context>

<pallas_src>
import functools

import jax
import jax.numpy as jnp
from jax import lax
from jax.experimental import pallas as pl
from jax.experimental.pallas import tpu as pltpu

_LANE = 128
_SUBLANE = 8


def _round_up(n, m):
    return ((n + m - 1) // m) * m


def _mlp_kernel(x_ref, w12_ref, b12_ref, gamma_ref, beta_ref, mask_ref,
                w3_ref, b3_ref, o_ref, *, inv_h1):
    x = x_ref[...]                                                # (TB, d) f32

    # Fused Linear1·Linear2 (+ eval-mode Dropouts == identity).
    h = jnp.dot(x, w12_ref[...], preferred_element_type=jnp.float32) + b12_ref[...]

    # LeakyReLU(negative_slope=0.3) == max(h, 0.3*h) since 0 < 0.3 < 1.
    h = jnp.maximum(h, 0.3 * h)

    # LayerNorm over the REAL hidden columns. Pad columns of h are exactly
    # zero (pad cols of w12/b12 are zero and LeakyReLU(0) == 0), so the
    # unmasked sum equals the masked one; the mask re-zeros pads of (h - mean)
    # so they do not pollute the variance.
    mask = mask_ref[...]
    mean = jnp.sum(h, axis=-1, keepdims=True) * inv_h1
    diff = (h - mean) * mask
    var = jnp.sum(diff * diff, axis=-1, keepdims=True) * inv_h1
    h = diff * lax.rsqrt(var + 1e-5)
    h = h * gamma_ref[...] + beta_ref[...]                        # pads stay 0

    # Output Linear + sigmoid, stored to a narrow (out_w-wide) output.
    y = jnp.dot(h, w3_ref[...], preferred_element_type=jnp.float32) + b3_ref[...]
    o_ref[...] = jax.nn.sigmoid(y)


def regression_mlp_forward(x, packed, dims, *, block_batch=4096):
    """x: (B, input_dim) or (B, S, F) with S*F == input_dim.
    Returns (y[:, 0], y[:, 1]) like the PyTorch module."""
    _, _, h1, output_dim = dims
    w12, b12, gamma, beta, mask, w3, b3 = packed

    x = x.astype(jnp.float32)
    if x.ndim == 3:                                   # x.view(x.shape[0], -1)
        x = x.reshape(x.shape[0], -1)
    B, d = x.shape
    if d != w12.shape[0]:
        raise ValueError(
            f"flattened feature size {d} != model input_dim {w12.shape[0]}")

    h1_pad = w12.shape[1]
    out_w = w3.shape[1]

    # Per-generation VMEM budget for the double-buffered x/o tiles.
    try:
        vmem_cap = int(getattr(pltpu.get_tpu_info(), "vmem_capacity_bytes",
                               64 << 20))
    except Exception:
        vmem_cap = 64 << 20
    tile_budget = min(24 << 20, vmem_cap // 4)
    row_bytes = 4 * (d + out_w)
    tb_cap = max(_SUBLANE,
                 (tile_budget // (2 * row_bytes)) // _SUBLANE * _SUBLANE)

    # Batch tile: tiny batches -> one full-array block (block dims == array
    # dims, always legal); otherwise a multiple of 8 chosen to give >= 2 grid
    # steps so the "parallel" axis can shard across v7x's two TensorCores.
    if B < 2 * _SUBLANE:
        tb = B
    else:
        tb = min(block_batch, _round_up(pl.cdiv(B, 2), _SUBLANE), tb_cap)
    grid = (pl.cdiv(B, tb),)

    x_spec = pl.BlockSpec((tb, d), lambda i: (i, 0))
    o_spec = pl.BlockSpec((tb, out_w), lambda i: (i, 0))

    def resident(p):
        # Same block index at every grid step -> param stays VMEM-resident.
        return pl.BlockSpec(p.shape, lambda i: (0, 0))

    param_specs = [resident(p) for p in packed]

    param_bytes = sum(int(p.size) * 4 for p in packed)
    tile_bytes = 2 * tb * row_bytes               # double-buffered x + o tiles
    vmem_limit = int(min(max(2 * param_bytes + tile_bytes + (2 << 20),
                             16 << 20),
                         max(vmem_cap // 2, 16 << 20)))

    cost = pl.CostEstimate(
        flops=2 * B * (d * h1_pad + h1_pad * out_w),
        transcendentals=B * (out_w + 1),              # sigmoid row + rsqrt
        bytes_accessed=B * row_bytes + param_bytes,
    )

    y = pl.pallas_call(
        functools.partial(_mlp_kernel, inv_h1=1.0 / float(h1)),
        out_shape=jax.ShapeDtypeStruct((B, out_w), jnp.float32),
        grid=grid,
        in_specs=[x_spec] + param_specs,
        out_specs=o_spec,
        compiler_params=pltpu.CompilerParams(
            dimension_semantics=("parallel",),
            vmem_limit_bytes=vmem_limit,
        ),
        cost_estimate=cost,
    )(x, *packed)

    return y[:, 0], y[:, 1]


def init_params_raw(key, input_dim, hidden_dims, output_dim):
    """nn.Linear / nn.LayerNorm style init at REAL (unpadded) shapes.
    Linear weights are stored pre-transposed to (in, out), biases as (1, out)."""
    h0, h1 = hidden_dims[0], hidden_dims[1]
    k1, k2, k3 = jax.random.split(key, 3)

    def lin(k, fan_in, fan_out):
        kw, kb = jax.random.split(k)
        bound = 1.0 / float(fan_in) ** 0.5
        w = jax.random.uniform(kw, (fan_in, fan_out), jnp.float32, -bound, bound)
        b = jax.random.uniform(kb, (1, fan_out), jnp.float32, -bound, bound)
        return w, b

    w1, b1 = lin(k1, input_dim, h0)
    w2, b2 = lin(k2, h0, h1)
    gamma = jnp.ones((h1,), jnp.float32)
    beta = jnp.zeros((h1,), jnp.float32)
    w3, b3 = lin(k3, h1, output_dim)

    raw = (w1, b1, w2, b2, gamma, beta, w3, b3)
    dims = (input_dim, h0, h1, output_dim)
    return raw, dims


def prepare_params(raw, dims):
    """Fuse Linear1·Linear2 (exact in eval mode) and zero-pad the hidden /
    output feature axes to lane-friendly widths. The input feature axis keeps
    its real width (no 128-lane padding of x in HBM)."""
    input_dim, h0, h1, output_dim = dims
    w1, b1, w2, b2, gamma, beta, w3, b3 = raw
    del input_dim, h0  # consumed by the fusion below

    w12 = w1 @ w2                       # (input_dim, h1), exact eval-mode fusion
    b12 = b1 @ w2 + b2                  # (1, h1)

    h1_pad = _round_up(h1, _LANE)
    out_w = _round_up(output_dim, _SUBLANE)
    pad_h = h1_pad - h1

    w12 = jnp.pad(w12, ((0, 0), (0, pad_h)))
    b12 = jnp.pad(b12, ((0, 0), (0, pad_h)))
    gamma_p = jnp.pad(gamma.reshape(1, h1), ((0, 0), (0, pad_h)))
    beta_p = jnp.pad(beta.reshape(1, h1), ((0, 0), (0, pad_h)))
    mask = jnp.pad(jnp.ones((1, h1), jnp.float32), ((0, 0), (0, pad_h)))
    w3_p = jnp.pad(w3, ((0, pad_h), (0, out_w - output_dim)))
    b3_p = jnp.pad(b3, ((0, 0), (0, out_w - output_dim)))

    return (w12, b12, gamma_p, beta_p, mask, w3_p, b3_p)


if __name__ == "__main__":
    # output_dim must be >= 2 (the module returns x[:, 0], x[:, 1]).
    input_dim = 16
    hidden_dims = [32, 32]
    output_dim = 2
    batch = 2

    key = jax.random.PRNGKey(0)
    k_x, k_p = jax.random.split(key)
    # 3-D input exercises the flatten branch: (batch, 4, 4) -> (batch, 16)
    x = jax.random.normal(k_x, (batch, 4, 4), jnp.float32)

    raw, dims = init_params_raw(k_p, input_dim, hidden_dims, output_dim)
    packed = prepare_params(raw, dims)

    y0, y1 = regression_mlp_forward(x, packed, dims)
    jax.block_until_ready((y0, y1))

    # Pure-JAX reference of the PyTorch eval-mode forward (unfused).
    w1, b1, w2, b2, gamma, beta, w3, b3 = raw
    xf = x.reshape(batch, -1).astype(jnp.float32)
    h = xf @ w1 + b1
    h = h @ w2 + b2
    h = jnp.maximum(h, 0.3 * h)
    mu = h.mean(-1, keepdims=True)
    var = ((h - mu) ** 2).mean(-1, keepdims=True)
    h = (h - mu) / jnp.sqrt(var + 1e-5) * gamma + beta
    yr = jax.nn.sigmoid(h @ w3 + b3)

    assert y0.shape == (batch,) and y1.shape == (batch,)
    assert bool(jnp.all(jnp.isfinite(y0))) and bool(jnp.all(jnp.isfinite(y1)))
    assert bool(jnp.all((y0 >= 0) & (y0 <= 1)))   # sigmoid output range
    assert bool(jnp.all((y1 >= 0) & (y1 <= 1)))
    assert bool(jnp.allclose(y0, yr[:, 0], atol=1e-5, rtol=1e-5))
    assert bool(jnp.allclose(y1, yr[:, 1], atol=1e-5, rtol=1e-5))
    print("KERNEL_OK")
</pallas_src>

<mosaic_0001>
module attributes {stable_mosaic.version = 11 : i64} {
  func.func @_mlp_kernel(%arg0: i32, %arg1: memref<2x16xf32, #tpu.memory_space<vmem>>, %arg2: memref<16x128xf32, #tpu.memory_space<vmem>>, %arg3: memref<1x128xf32, #tpu.memory_space<vmem>>, %arg4: memref<1x128xf32, #tpu.memory_space<vmem>>, %arg5: memref<1x128xf32, #tpu.memory_space<vmem>>, %arg6: memref<1x128xf32, #tpu.memory_space<vmem>>, %arg7: memref<128x8xf32, #tpu.memory_space<vmem>>, %arg8: memref<1x8xf32, #tpu.memory_space<vmem>>, %arg9: memref<2x8xf32, #tpu.memory_space<vmem>>) attributes {dimension_semantics = [#tpu.dimension_semantics<parallel>], iteration_bounds = array<i64: 1>, scalar_prefetch = 0 : i64, scratch_operands = 0 : i64, tpu.core_type = #tpu.core_type<tc>, window_params = [{transform_indices = @transform_0, window_bounds = array<i64: 2, 16>}, {pipeline_mode = #tpu.pipeline_mode<synchronous>, transform_indices = @transform_1, window_bounds = array<i64: 16, 128>}, {pipeline_mode = #tpu.pipeline_mode<synchronous>, transform_indices = @transform_2, window_bounds = array<i64: 1, 128>}, {pipeline_mode = #tpu.pipeline_mode<synchronous>, transform_indices = @transform_3, window_bounds = array<i64: 1, 128>}, {pipeline_mode = #tpu.pipeline_mode<synchronous>, transform_indices = @transform_4, window_bounds = array<i64: 1, 128>}, {pipeline_mode = #tpu.pipeline_mode<synchronous>, transform_indices = @transform_5, window_bounds = array<i64: 1, 128>}, {pipeline_mode = #tpu.pipeline_mode<synchronous>, transform_indices = @transform_6, window_bounds = array<i64: 128, 8>}, {pipeline_mode = #tpu.pipeline_mode<synchronous>, transform_indices = @transform_7, window_bounds = array<i64: 1, 8>}, {transform_indices = @transform_8, window_bounds = array<i64: 2, 8>}]} {
    %c0 = arith.constant 0 : index
    %c0_0 = arith.constant 0 : index
    %0 = vector.load %arg1[%c0, %c0_0] : memref<2x16xf32, #tpu.memory_space<vmem>>, vector<2x16xf32>
    %c0_1 = arith.constant 0 : index
    %c0_2 = arith.constant 0 : index
    %1 = vector.load %arg2[%c0_1, %c0_2] : memref<16x128xf32, #tpu.memory_space<vmem>>, vector<16x128xf32>
    %cst = arith.constant dense<0.000000e+00> : vector<2x128xf32>
    %2 = tpu.matmul %0, %1, %cst {dimension_numbers = #tpu.dot_dimension_numbers<[1], [0], [0], [1], [0, 0, 1, 1], [], []>} : vector<2x16xf32>, vector<16x128xf32>, vector<2x128xf32> -> vector<2x128xf32>
    %c0_3 = arith.constant 0 : index
    %c0_4 = arith.constant 0 : index
    %3 = vector.load %arg3[%c0_3, %c0_4] : memref<1x128xf32, #tpu.memory_space<vmem>>, vector<1x128xf32>
    %4 = vector.broadcast %3 : vector<1x128xf32> to vector<2x128xf32>
    %5 = arith.addf %2, %4 : vector<2x128xf32>
    %cst_5 = arith.constant 3.000000e-01 : f32
    %6 = vector.broadcast %cst_5 : f32 to vector<2x128xf32>
    %7 = arith.mulf %6, %5 : vector<2x128xf32>
    %8 = arith.maximumf %5, %7 : vector<2x128xf32>
    %c0_6 = arith.constant 0 : index
    %c0_7 = arith.constant 0 : index
    %9 = vector.load %arg6[%c0_6, %c0_7] : memref<1x128xf32, #tpu.memory_space<vmem>>, vector<1x128xf32>
    %cst_8 = arith.constant dense<0.000000e+00> : vector<2xf32>
    %10 = vector.multi_reduction <add>, %8, %cst_8 [1] : vector<2x128xf32> to vector<2xf32>
    %11 = vector.shape_cast %10 : vector<2xf32> to vector<2x1xf32>
    %cst_9 = arith.constant 3.125000e-02 : f32
    %12 = vector.broadcast %cst_9 : f32 to vector<2x1xf32>
    %13 = arith.mulf %11, %12 : vector<2x1xf32>
    %14 = vector.broadcast %13 : vector<2x1xf32> to vector<2x128xf32>
    %15 = arith.subf %8, %14 : vector<2x128xf32>
    %16 = vector.broadcast %9 : vector<1x128xf32> to vector<2x128xf32>
    %17 = arith.mulf %15, %16 : vector<2x128xf32>
    %18 = arith.mulf %17, %17 : vector<2x128xf32>
    %cst_10 = arith.constant dense<0.000000e+00> : vector<2xf32>
    %19 = vector.multi_reduction <add>, %18, %cst_10 [1] : vector<2x128xf32> to vector<2xf32>
    %20 = vector.shape_cast %19 : vector<2xf32> to vector<2x1xf32>
    %cst_11 = arith.constant 3.125000e-02 : f32
    %21 = vector.broadcast %cst_11 : f32 to vector<2x1xf32>
    %22 = arith.mulf %20, %21 : vector<2x1xf32>
    %cst_12 = arith.constant 9.99999974E-6 : f32
    %23 = vector.broadcast %cst_12 : f32 to vector<2x1xf32>
    %24 = arith.addf %22, %23 : vector<2x1xf32>
    %25 = math.rsqrt %24 : vector<2x1xf32>
    %26 = vector.broadcast %25 : vector<2x1xf32> to vector<2x128xf32>
    %27 = arith.mulf %17, %26 : vector<2x128xf32>
    %c0_13 = arith.constant 0 : index
    %c0_14 = arith.constant 0 : index
    %28 = vector.load %arg4[%c0_13, %c0_14] : memref<1x128xf32, #tpu.memory_space<vmem>>, vector<1x128xf32>
    %29 = vector.broadcast %28 : vector<1x128xf32> to vector<2x128xf32>
    %30 = arith.mulf %27, %29 : vector<2x128xf32>
    %c0_15 = arith.constant 0 : index
    %c0_16 = arith.constant 0 : index
    %31 = vector.load %arg5[%c0_15, %c0_16] : memref<1x128xf32, #tpu.memory_space<vmem>>, vector<1x128xf32>
    %32 = vector.broadcast %31 : vector<1x128xf32> to vector<2x128xf32>
    %33 = arith.addf %30, %32 : vector<2x128xf32>
    %c0_17 = arith.constant 0 : index
    %c0_18 = arith.constant 0 : index
    %34 = vector.load %arg7[%c0_17, %c0_18] : memref<128x8xf32, #tpu.memory_space<vmem>>, vector<128x8xf32>
    %cst_19 = arith.constant dense<0.000000e+00> : vector<2x8xf32>
    %35 = tpu.matmul %33, %34, %cst_19 {dimension_numbers = #tpu.dot_dimension_numbers<[1], [0], [0], [1], [0, 0, 1, 1], [], []>} : vector<2x128xf32>, vector<128x8xf32>, vector<2x8xf32> -> vector<2x8xf32>
    %c0_20 = arith.constant 0 : index
    %c0_21 = arith.constant 0 : index
    %36 = vector.load %arg8[%c0_20, %c0_21] : memref<1x8xf32, #tpu.memory_space<vmem>>, vector<1x8xf32>
    %37 = vector.broadcast %36 : vector<1x8xf32> to vector<2x8xf32>
    %38 = arith.addf %35, %37 : vector<2x8xf32>
    %39 = arith.negf %38 : vector<2x8xf32>
    %40 = math.exp %39 : vector<2x8xf32>
    %cst_22 = arith.constant 1.000000e+00 : f32
    %41 = vector.broadcast %cst_22 : f32 to vector<2x8xf32>
    %42 = arith.addf %41, %40 : vector<2x8xf32>
    %43 = arith.divf %41, %42 : vector<2x8xf32>
    %c0_23 = arith.constant 0 : index
    %c0_24 = arith.constant 0 : index
    %44 = vector.load %arg9[%c0_23, %c0_24] : memref<2x8xf32, #tpu.memory_space<vmem>>, vector<2x8xf32>
    tpu.vector_store %arg9[%c0_23, %c0_24], %43 {strides = array<i32>} : memref<2x8xf32, #tpu.memory_space<vmem>>, vector<2x8xf32>,
    return
  }
  func.func @transform_0(%arg0: i32) -> (i32, i32) {
    %c0_i32 = arith.constant 0 : i32
    %c0_i32_0 = arith.constant 0 : i32
    return %arg0, %c0_i32 : i32, i32
  }
  func.func @transform_1(%arg0: i32) -> (i32, i32) {
    %c0_i32 = arith.constant 0 : i32
    %c0_i32_0 = arith.constant 0 : i32
    %c0_i32_1 = arith.constant 0 : i32
    return %c0_i32, %c0_i32_0 : i32, i32
  }
  func.func @transform_2(%arg0: i32) -> (i32, i32) {
    %c0_i32 = arith.constant 0 : i32
    %c0_i32_0 = arith.constant 0 : i32
    %c0_i32_1 = arith.constant 0 : i32
    return %c0_i32, %c0_i32_0 : i32, i32
  }
  func.func @transform_3(%arg0: i32) -> (i32, i32) {
    %c0_i32 = arith.constant 0 : i32
    %c0_i32_0 = arith.constant 0 : i32
    %c0_i32_1 = arith.constant 0 : i32
    return %c0_i32, %c0_i32_0 : i32, i32
  }
  func.func @transform_4(%arg0: i32) -> (i32, i32) {
    %c0_i32 = arith.constant 0 : i32
    %c0_i32_0 = arith.constant 0 : i32
    %c0_i32_1 = arith.constant 0 : i32
    return %c0_i32, %c0_i32_0 : i32, i32
  }
  func.func @transform_5(%arg0: i32) -> (i32, i32) {
    %c0_i32 = arith.constant 0 : i32
    %c0_i32_0 = arith.constant 0 : i32
    %c0_i32_1 = arith.constant 0 : i32
    return %c0_i32, %c0_i32_0 : i32, i32
  }
  func.func @transform_6(%arg0: i32) -> (i32, i32) {
    %c0_i32 = arith.constant 0 : i32
    %c0_i32_0 = arith.constant 0 : i32
    %c0_i32_1 = arith.constant 0 : i32
    return %c0_i32, %c0_i32_0 : i32, i32
  }
  func.func @transform_7(%arg0: i32) -> (i32, i32) {
    %c0_i32 = arith.constant 0 : i32
    %c0_i32_0 = arith.constant 0 : i32
    %c0_i32_1 = arith.constant 0 : i32
    return %c0_i32, %c0_i32_0 : i32, i32
  }
  func.func @transform_8(%arg0: i32) -> (i32, i32) {
    %c0_i32 = arith.constant 0 : i32
    %c0_i32_0 = arith.constant 0 : i32
    return %arg0, %c0_i32 : i32, i32
  }
}

</mosaic_0001>

<llo_original>
// kernel: tpu_custom_call.1
$region0: #{tpu_custom_call.1}
  #allocation0 [shape = 'u32[]', space=smem, size = 0x4, offset = 0x4, fixed_abs, tag = 'smem constant byte address 0x4 - core index']
  #allocation1 [shape = 'u32[72,128]{1,0:T(1,128)}', space=vmem, size = 0x9000, scoped, tag = 'internal scratch']
  %s0 = inlined_call_operand.vmem [shape: f32[2,16], index: 0, kind: input, shape index: {}]
  %s1 = inlined_call_operand.vmem [shape: f32[16,128], index: 1, kind: input, shape index: {}]
  %s2 = inlined_call_operand.vmem [shape: f32[1,128], index: 2, kind: input, shape index: {}]
  %s3 = inlined_call_operand.vmem [shape: f32[1,128], index: 3, kind: input, shape index: {}]
  %s4 = inlined_call_operand.vmem [shape: f32[1,128], index: 4, kind: input, shape index: {}]
  %s5 = inlined_call_operand.vmem [shape: f32[1,128], index: 5, kind: input, shape index: {}]
  %s6 = inlined_call_operand.vmem [shape: f32[128,8], index: 6, kind: input, shape index: {}]
  %s7 = inlined_call_operand.vmem [shape: f32[1,8], index: 7, kind: input, shape index: {}]
  %s8 = inlined_call_operand.hbm [shape: f32[2,8], index: 8, kind: output, shape index: {}]
  %s9 = sld [smem:[#allocation0]]
  $region42: #{tpu_custom_call.1} parent=0
    _
  %s11 = ssub.s32 1, %s9
  %s12 = scalar_select 0, %s11, %s9
  $region1: #{tpu_custom_call.1} parent=0
    #allocation2 [shape = 'u8[1024]{0}', space=vmem, size = 0x400, scoped, tag = 'output window, operand 0, single buffered']
    #allocation3 [shape = 's32[1]{0}', space=sflag, size = 0x4, scoped, tag = 'scoped memory for tpu_custom_call.1']
    %13 = vsyncpa [#allocation3], 0
    // Predicated region
    $region2: #{tpu_custom_call.1} parent=1 // pred_check
      _
    $region3: #{tpu_custom_call.1} parent=1 // pred_check_branch
      %15 = sbr.rel (0) target = $region5
    $region4: #{tpu_custom_call.1} parent=1 // pred_region
      _
    $region5: #{tpu_custom_call.1} parent=1 // pred_fallthru
      _
    // Predicated region
    $region6: #{tpu_custom_call.1} parent=1 // pred_check
      _
    $region7: #{tpu_custom_call.1} parent=1 // pred_check_branch
      %17 = sbr.rel (0) target = $region9
    $region8: #{tpu_custom_call.1} parent=1 // pred_region
      _
    $region9: #{tpu_custom_call.1} parent=1 // pred_fallthru
      _
    // Predicated region
    $region10: #{tpu_custom_call.1} parent=1 // pred_check
      _
    $region11: #{tpu_custom_call.1} parent=1 // pred_check_branch
      %19 = sbr.rel (0) target = $region13
    $region12: #{tpu_custom_call.1} parent=1 // pred_region
      _
    $region13: #{tpu_custom_call.1} parent=1 // pred_fallthru
      _
    // Predicated region
    $region14: #{tpu_custom_call.1} parent=1 // pred_check
      _
    $region15: #{tpu_custom_call.1} parent=1 // pred_check_branch
      %21 = sbr.rel (0) target = $region17
    $region16: #{tpu_custom_call.1} parent=1 // pred_region
      _
    $region17: #{tpu_custom_call.1} parent=1 // pred_fallthru
      _
    // Predicated region
    $region18: #{tpu_custom_call.1} parent=1 // pred_check
      _
    $region19: #{tpu_custom_call.1} parent=1 // pred_check_branch
      %23 = sbr.rel (0) target = $region21
    $region20: #{tpu_custom_call.1} parent=1 // pred_region
      _
    $region21: #{tpu_custom_call.1} parent=1 // pred_fallthru
      _
    // Predicated region
    $region22: #{tpu_custom_call.1} parent=1 // pred_check
      _
    $region23: #{tpu_custom_call.1} parent=1 // pred_check_branch
      %25 = sbr.rel (0) target = $region25
    $region24: #{tpu_custom_call.1} parent=1 // pred_region
      _
    $region25: #{tpu_custom_call.1} parent=1 // pred_fallthru
      _
    // Predicated region
    $region26: #{tpu_custom_call.1} parent=1 // pred_check
      _
    $region27: #{tpu_custom_call.1} parent=1 // pred_check_branch
      %27 = sbr.rel (0) target = $region29
    $region28: #{tpu_custom_call.1} parent=1 // pred_region
      _
    $region29: #{tpu_custom_call.1} parent=1 // pred_fallthru
      _
    // Predicated region
    $region30: #{tpu_custom_call.1} parent=1 // pred_check
      _
    $region31: #{tpu_custom_call.1} parent=1 // pred_check_branch
      %29 = sbr.rel (0) target = $region33
    $region32: #{tpu_custom_call.1} parent=1 // pred_region
      _
    $region33: #{tpu_custom_call.1} parent=1 // pred_fallthru
      _
    %v30 = vld [vmem:[%s0] sm:$0x3]
    %v31 = vld [vmem:[%s1] sm:$0xff]
    %v32 = vld [vmem:[%s1 + $0x8] sm:$0xff]
    %v33 = vld [vmem:[%s2] sm:$0x1]
    %v35 = vperm.slane %v33, 0
    %vm37 = vcmask 130048
    %v39 = vsel %vm37, %v30, 0
    %41 = vmatpush.msra.mxu0 0.0
    %42 = vmatpush.msra.mxu0 0.0
    %43 = vmatpush.msra.mxu0 0.0
    %44 = vmatpush.msra.mxu0 0.0
    %45 = vmatpush.msra.mxu0 0.0
    %46 = vmatpush.msra.mxu0 0.0
    %47 = vmatpush.msra.mxu0 0.0
    %48 = vmatpush.msra.mxu0 0.0
    %49 = vmatpush.msra.mxu0 0.0
    %50 = vmatpush.msra.mxu0 0.0
    %51 = vmatpush.msra.mxu0 0.0
    %52 = vmatpush.msra.mxu0 0.0
    %53 = vmatpush.msra.mxu0 0.0
    %54 = vmatpush.msra.mxu0 0.0
    %55 = vmatpush.msra.mxu0 %v32
    %56 = vmatpush.msra.mxu0 %v31
    %57 = vmatmul.f32.gmra.mxu0 %v39
    %v58 = vpop.f32.mrf.mxu0
    %v59 = vadd.f32 %v35, %v58
    %60 = vdwg.mxu0
    %v61 = vmul.f32 %v59, 0.3
    %v62 = vmax.f32 %v59, %v61
    %v63 = vld [vmem:[%s5] sm:$0x1]
    %vm64 = vcmask 1041408
    %v65 = vsel %vm64, %v62, 0.0
    %66 = vadd.xlane.f32.xlu0 %v65
    %v67 = vpop.xlane.xlu0 %66
    %v68 = vmul.f32 %v67, 0.03125
    %v69 = vsub.f32 %v62, %v68
    %v71 = vperm.slane %v63, 0
    %v73 = vmul.f32 %v69, %v71
    %v74 = vmul.f32 %v73, %v73
    %v75 = vsel %vm64, %v74, 0.0
    %76 = vadd.xlane.f32.xlu0 %v75
    %v77 = vpop.xlane.xlu0 %76
    %v78 = vmul.f32 %v77, 0.03125
    %v79 = vadd.f32 %v78, 1e-05
    %v80 = vrsqrt.pop %v79
    %v81 = vmul.f32 %v80, %v79
    %v82 = vmul.f32 %v81, %v80
    %v83 = vmul.f32 0.5, %v82
    %v84 = vsub.f32 1.5, %v83
    %v85 = vmul.f32 %v80, %v84
    %vm86 = vweird.f32 %v79
    %vm87 = vweird.f32 %v80
    %vm88 = vmor %vm86, %vm87
    %v89 = vsel %vm88, %v80, %v85
    %v90 = vmul.f32 %v73, %v89
    %v91 = vld [vmem:[%s3] sm:$0x1]
    %v93 = vperm.slane %v91, 0
    %v95 = vmul.f32 %v90, %v93
    %v96 = vld [vmem:[%s4] sm:$0x1]
    %v98 = vperm.slane %v96, 0
    %v100 = vadd.f32 %v95, %v98
    %v101 = vld [vmem:[%s6] sm:$0xff]
    %v102 = vld [vmem:[%s6 + $0x8] sm:$0xff]
    %v103 = vld [vmem:[%s6 + $0x10] sm:$0xff]
    %v104 = vld [vmem:[%s6 + $0x18] sm:$0xff]
    %v105 = vld [vmem:[%s6 + $0x20] sm:$0xff]
    %v106 = vld [vmem:[%s6 + $0x28] sm:$0xff]
    %v107 = vld [vmem:[%s6 + $0x30] sm:$0xff]
    %v108 = vld [vmem:[%s6 + $0x38] sm:$0xff]
    %v109 = vld [vmem:[%s6 + $0x40] sm:$0xff]
    %v110 = vld [vmem:[%s6 + $0x48] sm:$0xff]
    %v111 = vld [vmem:[%s6 + $0x50] sm:$0xff]
    %v112 = vld [vmem:[%s6 + $0x58] sm:$0xff]
    %v113 = vld [vmem:[%s6 + $0x60] sm:$0xff]
    %v114 = vld [vmem:[%s6 + $0x68] sm:$0xff]
    %v115 = vld [vmem:[%s6 + $0x70] sm:$0xff]
    %v116 = vld [vmem:[%s6 + $0x78] sm:$0xff]
    %v117 = vld [vmem:[%s7] sm:$0x1]
    %v119 = vperm.slane %v117, 0
    %121 = vmatpush.msra.mxu0 %v116
    %122 = vmatpush.msra.mxu0 %v115
    %123 = vmatpush.msra.mxu0 %v114
    %124 = vmatpush.msra.mxu0 %v113
    %125 = vmatpush.msra.mxu0 %v112
    %126 = vmatpush.msra.mxu0 %v111
    %127 = vmatpush.msra.mxu0 %v110
    %128 = vmatpush.msra.mxu0 %v109
    %129 = vmatpush.msra.mxu0 %v108
    %130 = vmatpush.msra.mxu0 %v107
    %131 = vmatpush.msra.mxu0 %v106
    %132 = vmatpush.msra.mxu0 %v105
    %133 = vmatpush.msra.mxu0 %v104
    %134 = vmatpush.msra.mxu0 %v103
    %135 = vmatpush.msra.mxu0 %v102
    %136 = vmatpush.msra.mxu0 %v101
    %137 = vmatmul.f32.gmra.mxu0 %v100
    %v138 = vpop.f32.mrf.mxu0
    %v139 = vadd.f32 %v119, %v138
    %140 = vdwg.mxu0
    %v141 = vxor.u32 %v139, 2147483648
    %v142 = vmul.f32 %v141, 1.442695
    %v143 = vpow.pop %v142
    %v144 = vadd.f32 %v143, 1.0
    %v145 = vrcp.pop %v144
    %v146 = vmul.f32 %v144, %v145
    %v147 = vsub.f32 1.0, %v146
    %v148 = vmul.f32 %v145, %v147
    %v149 = vadd.f32 %v145, %v148
    %vm150 = vweird.f32 %v144
    %vm151 = vweird.f32 %v145
    %vm152 = vmor %vm150, %vm151
    %v153 = vsel %vm152, %v145, %v149
    %v154 = vand.u32 2147483647, %v144
    %vm155 = vcmp.eq.f32.partialorder %v154, 8.507059e+37
    %v156 = vand.u32 %v144, 2147483648
    %v157 = vor.u32 1.1754944e-38, %v156
    %v158 = vsel %vm155, %v157, %v153
    %v159 = vmul.f32 1.0, %v158
    %vm160 = vcmask 58368
    %161 = vst.msk [vmem:[#allocation2] sm:$0x3] %vm160, %v159
    // Predicated region
    $region34: #{tpu_custom_call.1} parent=1 // pred_check
      _
    $region35: #{tpu_custom_call.1} parent=1 // pred_check_branch
      %163 = sbr.rel (0) target = $region37
    $region36: #{tpu_custom_call.1} parent=1 // pred_region
      %165 = vsyncadd [#allocation3], 0
      %s167 = sshll.u32 [#allocation2], 4
      %s168 = int_to_ptr.vmem [resolvable:$true] %s167
      %s169 = sshll.u32 %s8, 4
      %s170 = int_to_ptr.hbm [resolvable:$true] %s169
      %172 = dma.vmem_to_hbm [thread:$0]  %s168, 32, %s170, [#allocation3]
    $region37: #{tpu_custom_call.1} parent=1 // pred_fallthru
      _
    // Predicated region
    $region38: #{tpu_custom_call.1} parent=1 // pred_check
      _
    $region39: #{tpu_custom_call.1} parent=1 // pred_check_branch
      %174 = sbr.rel (0) target = $region41
    $region40: #{tpu_custom_call.1} parent=1 // pred_region
      %176 = dma.done [#allocation3], 32
    $region41: #{tpu_custom_call.1} parent=1 // pred_fallthru
      _
    %177 = vsyncpa [#allocation3], 1

</llo_original>
